<compile_context>
chip_gen: v7x
topology: tpu7x:2x2x1
jax: 0.10.0
libtpu: 0.0.40
codegen_flags: <defaults>
</compile_context>

<pallas_src>
import jax
import jax.numpy as jnp
from jax import lax
from jax.experimental import pallas as pl
from jax.experimental.pallas import tpu as pltpu

N_LMK = 543
N_COORD = 3
N_COLS = N_LMK * N_COORD           # 1629
FACE_END = 468 * N_COORD           # 1404  (face  cols: [0, 1404))
LEFT_END = 489 * N_COORD           # 1467  (left  cols: [1404, 1467))
POSE_END = 522 * N_COORD           # 1566  (pose  cols: [1467, 1566))
                                   #        right cols: [1566, 1629)
OUT_LEN = 2 * N_COLS               # 3258

C_TILE = 896                       # 7 * 128 lanes per column tile
N_C_TILES = 2                      # 2 * 896 = 1792 >= 1629 (extra cols are
                                   # garbage and sliced off at the end)
TILE_T_MAX = 512                   # frames per grid step (multiple of 8)

# All 126 hand columns live, for column tile c == 1, inside the lane-aligned
# local window [384, 768): left hand -> local [508, 571), right -> [670, 733).
# For c == 0 this window holds only face columns, so it never drops frames.
HAND_LO = 384
HAND_HI = 768

_RPACK = 65536.0                   # packing factor for the fused row reduction
_INV_RPACK = 1.0 / _RPACK


def _make_kernel(T, tile_t, n_t, rem):
    def kernel(x_ref, o_ref, cnt_ref, sum_ref, ssq_ref, shift_ref):
        c = pl.program_id(0)       # column tile  ("parallel"  -> 2 TCs on v7x)
        t = pl.program_id(1)       # time tile    ("arbitrary" -> reduction)

        x = x_ref[...]                                        # (tile_t, C_TILE) f32
        col0 = c * C_TILE

        # (1, C_TILE) global column classification (lane-only iota).
        col = lax.broadcasted_iota(jnp.int32, (1, C_TILE), 1) + col0
        is_left = (col >= FACE_END) & (col < LEFT_END)
        is_right = (col >= POSE_END) & (col < N_COLS)

        @pl.when(t == 0)
        def _init():
            cnt_ref[...] = jnp.zeros_like(cnt_ref)
            sum_ref[...] = jnp.zeros_like(sum_ref)
            ssq_ref[...] = jnp.zeros_like(ssq_ref)
            # Per-column shift = first frame's value (NaN -> 0).  Keeps the
            # one-pass sum-of-squares numerically safe (shifted accumulation).
            first = x[0:1, :]
            shift_ref[...] = jnp.where(jnp.isnan(first), 0.0, first)

        # --- packed hand-NaN scan restricted to the hand lane-group window:
        #     code = (#left-hand NaNs in row) + 65536 * (#right-hand NaNs)
        #     (<= 63 + 63*65536 < 2^24, exact in f32)
        colw = (lax.broadcasted_iota(jnp.int32, (1, HAND_HI - HAND_LO), 1)
                + (HAND_LO + col0))
        tagw = (jnp.where((colw >= FACE_END) & (colw < LEFT_END), 1.0, 0.0)
                + jnp.where((colw >= POSE_END) & (colw < N_COLS), _RPACK, 0.0))
        xw = x[:, HAND_LO:HAND_HI]                            # lane-aligned slice
        code = jnp.sum(jnp.where(jnp.isnan(xw), tagw, 0.0), axis=1, keepdims=True)
        r_cnt = jnp.floor(code * _INV_RPACK)
        right_bad = r_cnt > 0.5                               # (tile_t, 1)
        left_bad = (code - r_cnt * _RPACK) > 0.5              # (tile_t, 1)

        # Hand columns only drop their own bad frames.
        invalid = (is_left & left_bad) | (is_right & right_bad)   # (tile_t, C_TILE)
        xs = x - shift_ref[...]

        def accumulate(row_valid):
            # Row-sums stay on the VPU (not MXU-offloaded) to keep full f32
            # accumulation accuracy for the unbiased std.
            if row_valid is None:              # full tile, no garbage rows
                xm = jnp.where(invalid, 0.0, xs)     # select, never multiply
                c_all = jnp.full((1, 1), float(tile_t), jnp.float32)
                c_left = c_all - jnp.sum(left_bad.astype(jnp.float32),
                                         axis=0, keepdims=True)
                c_right = c_all - jnp.sum(right_bad.astype(jnp.float32),
                                          axis=0, keepdims=True)
            else:                              # ragged last tile
                valid = row_valid & jnp.logical_not(invalid)
                xm = jnp.where(valid, xs, 0.0)
                rv = row_valid.astype(jnp.float32)
                c_all = jnp.sum(rv, axis=0, keepdims=True)
                c_left = jnp.sum(jnp.where(left_bad, 0.0, rv), axis=0, keepdims=True)
                c_right = jnp.sum(jnp.where(right_bad, 0.0, rv), axis=0, keepdims=True)
            cnt_ref[...] += jnp.where(is_left, c_left,
                                      jnp.where(is_right, c_right, c_all))
            sum_ref[...] += jnp.sum(xm, axis=0, keepdims=True)
            ssq_ref[...] += jnp.sum(xm * xm, axis=0, keepdims=True)

        if rem == 0:
            accumulate(None)                   # T % tile_t == 0: never ragged
        else:
            @pl.when(t < n_t - 1)
            def _interior():
                accumulate(None)

            @pl.when(t == n_t - 1)
            def _tail():
                row = lax.broadcasted_iota(jnp.int32, (tile_t, 1), 0) + t * tile_t
                accumulate(row < T)

        @pl.when(t == n_t - 1)
        def _finalize():
            n = cnt_ref[...]
            mean_s = sum_ref[...] / n                          # 0/0 -> NaN (empty)
            mean = mean_s + shift_ref[...]
            var = (ssq_ref[...] - n * mean_s * mean_s) / (n - 1.0)   # Bessel
            var = jnp.maximum(var, 0.0)        # clamp f32 cancellation; keeps NaN
            std = jnp.sqrt(var)
            o_ref[0:1, :] = jnp.where(jnp.isnan(mean), 0.0, mean)
            o_ref[1:2, :] = jnp.where(jnp.isnan(std), 0.0, std)

    return kernel


def feature_gen(x):
    """x: (T, 543, 3) float -> (3258,) float32, matching TorchFeatureGen.forward."""
    T = x.shape[0]
    xf = x.reshape(T, N_COLS).astype(jnp.float32)      # unpadded, streamed directly

    tile_t = min(TILE_T_MAX, ((T + 7) // 8) * 8)       # blocks (tile_t, 896) f32
    n_t = (T + tile_t - 1) // tile_t
    rem = T % tile_t                                   # 0 -> no tail masking needed

    kernel = _make_kernel(T, tile_t, n_t, rem)

    out2 = pl.pallas_call(
        kernel,
        out_shape=jax.ShapeDtypeStruct((2, N_C_TILES * C_TILE), jnp.float32),
        grid_spec=pltpu.PrefetchScalarGridSpec(
            num_scalar_prefetch=0,
            grid=(N_C_TILES, n_t),                     # (column tiles, time tiles)
            in_specs=[pl.BlockSpec((tile_t, C_TILE), lambda c, t: (t, c))],
            out_specs=pl.BlockSpec((2, C_TILE), lambda c, t: (0, c)),
            scratch_shapes=[
                pltpu.VMEM((1, C_TILE), jnp.float32),  # count per column
                pltpu.VMEM((1, C_TILE), jnp.float32),  # sum of shifted values
                pltpu.VMEM((1, C_TILE), jnp.float32),  # sum of squared shifted values
                pltpu.VMEM((1, C_TILE), jnp.float32),  # per-column shift
            ],
        ),
        compiler_params=pltpu.CompilerParams(
            dimension_semantics=("parallel", "arbitrary"),
            vmem_limit_bytes=32 * 1024 * 1024),
    )(xf)

    return out2[:, :N_COLS].reshape(OUT_LEN)


def _reference(x):
    """Pure-JAX (eager) reference mirroring the torch code."""
    T = x.shape[0]
    xf = x.reshape(T, N_COLS).astype(jnp.float32)
    face = xf[:, :FACE_END]
    lefth = xf[:, FACE_END:LEFT_END]
    pose = xf[:, LEFT_END:POSE_END]
    righth = xf[:, POSE_END:]
    lefth = lefth[~jnp.any(jnp.isnan(lefth), axis=1)]
    righth = righth[~jnp.any(jnp.isnan(righth), axis=1)]
    parts = [face, lefth, pose, righth]
    means = [jnp.mean(p, axis=0) for p in parts]
    stds = [jnp.std(p, axis=0, ddof=1) for p in parts]
    feat = jnp.concatenate(means + stds, axis=0)
    return jnp.where(jnp.isnan(feat), 0.0, feat)


if __name__ == "__main__":
    key = jax.random.PRNGKey(0)

    def make_input(k, T):
        x = jax.random.normal(k, (T, N_LMK, N_COORD), dtype=jnp.float32)
        # Inject NaNs to exercise every code path:
        x = x.at[1, 470, 0].set(jnp.nan)   # left-hand NaN  -> frame 1 dropped for left hand
        x = x.at[3, 530, 2].set(jnp.nan)   # right-hand NaN -> frame 3 dropped for right hand
        x = x.at[0, 10, 1].set(jnp.nan)    # face NaN       -> that face column's stats -> 0
        if T > 512:                        # drops inside the ragged tail tile too
            x = x.at[600, 475, 1].set(jnp.nan)
            x = x.at[650, 535, 0].set(jnp.nan)
        return x

    # 8: exact tile (unmasked path); 300: single ragged tile; 700: interior + tail tiles.
    for T in (8, 300, 700):
        k = jax.random.fold_in(key, T)
        x = make_input(k, T)
        out = feature_gen(x)
        jax.block_until_ready(out)
        assert out.shape == (OUT_LEN,), out.shape
        ref = _reference(x)
        assert not bool(jnp.any(jnp.isnan(out)))
        assert bool(jnp.allclose(out, ref, atol=1e-4, rtol=1e-4)), (
            T, float(jnp.max(jnp.abs(out - ref))))

    print("KERNEL_OK")
</pallas_src>

<mosaic_0001>
module attributes {stable_mosaic.version = 11 : i64} {
  func.func @kernel(%arg0: i32, %arg1: i32, %arg2: memref<8x896xf32, #tpu.memory_space<vmem>>, %arg3: memref<2x896xf32, #tpu.memory_space<vmem>>, %arg4: memref<1x896xf32, #tpu.memory_space<vmem>>, %arg5: memref<1x896xf32, #tpu.memory_space<vmem>>, %arg6: memref<1x896xf32, #tpu.memory_space<vmem>>, %arg7: memref<1x896xf32, #tpu.memory_space<vmem>>) attributes {dimension_semantics = [#tpu.dimension_semantics<parallel>, #tpu.dimension_semantics<arbitrary>], iteration_bounds = array<i64: 2, 1>, scalar_prefetch = 0 : i64, scratch_operands = 4 : i64, tpu.core_type = #tpu.core_type<tc>, window_params = [{transform_indices = @transform_0, window_bounds = array<i64: 8, 896>}, {transform_indices = @transform_1, window_bounds = array<i64: 2, 896>}]} {
    %c0 = arith.constant 0 : index
    %c0_0 = arith.constant 0 : index
    %0 = vector.load %arg2[%c0, %c0_0] : memref<8x896xf32, #tpu.memory_space<vmem>>, vector<8x896xf32>
    %c896_i32 = arith.constant 896 : i32
    %1 = arith.muli %arg0, %c896_i32 : i32
    %2 = tpu.iota {dimensions = array<i32: 1>} : vector<1x896xi32>
    %3 = vector.broadcast %1 : i32 to vector<1x896xi32>
    %4 = arith.addi %2, %3 : vector<1x896xi32>
    %c1404_i32 = arith.constant 1404 : i32
    %5 = vector.broadcast %c1404_i32 : i32 to vector<1x896xi32>
    %6 = arith.cmpi sge, %4, %5 : vector<1x896xi32>
    %c1467_i32 = arith.constant 1467 : i32
    %7 = vector.broadcast %c1467_i32 : i32 to vector<1x896xi32>
    %8 = arith.cmpi slt, %4, %7 : vector<1x896xi32>
    %9 = arith.andi %6, %8 : vector<1x896xi1>
    %c1566_i32 = arith.constant 1566 : i32
    %10 = vector.broadcast %c1566_i32 : i32 to vector<1x896xi32>
    %11 = arith.cmpi sge, %4, %10 : vector<1x896xi32>
    %c1629_i32 = arith.constant 1629 : i32
    %12 = vector.broadcast %c1629_i32 : i32 to vector<1x896xi32>
    %13 = arith.cmpi slt, %4, %12 : vector<1x896xi32>
    %14 = arith.andi %11, %13 : vector<1x896xi1>
    %c0_i32 = arith.constant 0 : i32
    %15 = arith.cmpi eq, %arg1, %c0_i32 : i32
    %16 = arith.extui %15 : i1 to i32
    %c0_i32_1 = arith.constant 0 : i32
    %17 = arith.cmpi ne, %16, %c0_i32_1 : i32
    scf.if %17 {
      %cst_37 = arith.constant 0.000000e+00 : f32
      %105 = vector.broadcast %cst_37 : f32 to vector<1x896xf32>
      %c0_38 = arith.constant 0 : index
      %c0_39 = arith.constant 0 : index
      %106 = vector.load %arg4[%c0_38, %c0_39] : memref<1x896xf32, #tpu.memory_space<vmem>>, vector<1x896xf32>
      tpu.vector_store %arg4[%c0_38, %c0_39], %105 {strides = array<i32>} : memref<1x896xf32, #tpu.memory_space<vmem>>, vector<1x896xf32>,
      %cst_40 = arith.constant 0.000000e+00 : f32
      %107 = vector.broadcast %cst_40 : f32 to vector<1x896xf32>
      %c0_41 = arith.constant 0 : index
      %c0_42 = arith.constant 0 : index
      %108 = vector.load %arg5[%c0_41, %c0_42] : memref<1x896xf32, #tpu.memory_space<vmem>>, vector<1x896xf32>
      tpu.vector_store %arg5[%c0_41, %c0_42], %107 {strides = array<i32>} : memref<1x896xf32, #tpu.memory_space<vmem>>, vector<1x896xf32>,
      %cst_43 = arith.constant 0.000000e+00 : f32
      %109 = vector.broadcast %cst_43 : f32 to vector<1x896xf32>
      %c0_44 = arith.constant 0 : index
      %c0_45 = arith.constant 0 : index
      %110 = vector.load %arg6[%c0_44, %c0_45] : memref<1x896xf32, #tpu.memory_space<vmem>>, vector<1x896xf32>
      tpu.vector_store %arg6[%c0_44, %c0_45], %109 {strides = array<i32>} : memref<1x896xf32, #tpu.memory_space<vmem>>, vector<1x896xf32>,
      %111 = vector.extract_strided_slice %0 {offsets = [0, 0], sizes = [1, 896], strides = [1, 1]} : vector<8x896xf32> to vector<1x896xf32>
      %112 = arith.cmpf one, %111, %111 : vector<1x896xf32>
      %cst_46 = arith.constant 0.000000e+00 : f32
      %113 = vector.broadcast %cst_46 : f32 to vector<1x896xf32>
      %114 = arith.select %112, %113, %111 : vector<1x896xi1>, vector<1x896xf32>
      %c0_47 = arith.constant 0 : index
      %c0_48 = arith.constant 0 : index
      %115 = vector.load %arg7[%c0_47, %c0_48] : memref<1x896xf32, #tpu.memory_space<vmem>>, vector<1x896xf32>
      tpu.vector_store %arg7[%c0_47, %c0_48], %114 {strides = array<i32>} : memref<1x896xf32, #tpu.memory_space<vmem>>, vector<1x896xf32>,
    } else {
    }
    %18 = tpu.iota {dimensions = array<i32: 1>} : vector<1x384xi32>
    %c384_i32 = arith.constant 384 : i32
    %19 = arith.addi %c384_i32, %1 : i32
    %20 = vector.broadcast %19 : i32 to vector<1x384xi32>
    %21 = arith.addi %18, %20 : vector<1x384xi32>
    %c1404_i32_2 = arith.constant 1404 : i32
    %22 = vector.broadcast %c1404_i32_2 : i32 to vector<1x384xi32>
    %23 = arith.cmpi sge, %21, %22 : vector<1x384xi32>
    %c1467_i32_3 = arith.constant 1467 : i32
    %24 = vector.broadcast %c1467_i32_3 : i32 to vector<1x384xi32>
    %25 = arith.cmpi slt, %21, %24 : vector<1x384xi32>
    %26 = arith.andi %23, %25 : vector<1x384xi1>
    %cst = arith.constant 1.000000e+00 : f32
    %cst_4 = arith.constant 0.000000e+00 : f32
    %27 = vector.broadcast %cst : f32 to vector<1x384xf32>
    %28 = vector.broadcast %cst_4 : f32 to vector<1x384xf32>
    %29 = arith.select %26, %27, %28 : vector<1x384xi1>, vector<1x384xf32>
    %c1566_i32_5 = arith.constant 1566 : i32
    %30 = vector.broadcast %c1566_i32_5 : i32 to vector<1x384xi32>
    %31 = arith.cmpi sge, %21, %30 : vector<1x384xi32>
    %c1629_i32_6 = arith.constant 1629 : i32
    %32 = vector.broadcast %c1629_i32_6 : i32 to vector<1x384xi32>
    %33 = arith.cmpi slt, %21, %32 : vector<1x384xi32>
    %34 = arith.andi %31, %33 : vector<1x384xi1>
    %cst_7 = arith.constant 6.553600e+04 : f32
    %cst_8 = arith.constant 0.000000e+00 : f32
    %35 = vector.broadcast %cst_7 : f32 to vector<1x384xf32>
    %36 = vector.broadcast %cst_8 : f32 to vector<1x384xf32>
    %37 = arith.select %34, %35, %36 : vector<1x384xi1>, vector<1x384xf32>
    %38 = arith.addf %29, %37 : vector<1x384xf32>
    %39 = vector.extract_strided_slice %0 {offsets = [0, 384], sizes = [8, 384], strides = [1, 1]} : vector<8x896xf32> to vector<8x384xf32>
    %40 = arith.cmpf one, %39, %39 : vector<8x384xf32>
    %cst_9 = arith.constant 0.000000e+00 : f32
    %41 = vector.shape_cast %38 : vector<1x384xf32> to vector<1x384xf32>
    %42 = vector.broadcast %41 : vector<1x384xf32> to vector<8x384xf32>
    %43 = vector.broadcast %cst_9 : f32 to vector<8x384xf32>
    %44 = arith.select %40, %42, %43 : vector<8x384xi1>, vector<8x384xf32>
    %cst_10 = arith.constant dense<0.000000e+00> : vector<8xf32>
    %45 = vector.multi_reduction <add>, %44, %cst_10 [1] : vector<8x384xf32> to vector<8xf32>
    %46 = vector.shape_cast %45 : vector<8xf32> to vector<8x1xf32>
    %cst_11 = arith.constant 1.52587891E-5 : f32
    %47 = vector.broadcast %cst_11 : f32 to vector<8x1xf32>
    %48 = arith.mulf %46, %47 : vector<8x1xf32>
    %49 = math.floor %48 : vector<8x1xf32>
    %cst_12 = arith.constant 5.000000e-01 : f32
    %50 = vector.broadcast %cst_12 : f32 to vector<8x1xf32>
    %51 = arith.cmpf ogt, %49, %50 : vector<8x1xf32>
    %cst_13 = arith.constant 6.553600e+04 : f32
    %52 = vector.broadcast %cst_13 : f32 to vector<8x1xf32>
    %53 = arith.mulf %49, %52 : vector<8x1xf32>
    %54 = arith.subf %46, %53 : vector<8x1xf32>
    %cst_14 = arith.constant 5.000000e-01 : f32
    %55 = vector.broadcast %cst_14 : f32 to vector<8x1xf32>
    %56 = arith.cmpf ogt, %54, %55 : vector<8x1xf32>
    %57 = vector.broadcast %9 : vector<1x896xi1> to vector<8x896xi1>
    %58 = vector.broadcast %56 : vector<8x1xi1> to vector<8x896xi1>
    %59 = arith.andi %57, %58 : vector<8x896xi1>
    %60 = vector.broadcast %14 : vector<1x896xi1> to vector<8x896xi1>
    %61 = vector.broadcast %51 : vector<8x1xi1> to vector<8x896xi1>
    %62 = arith.andi %60, %61 : vector<8x896xi1>
    %63 = arith.ori %59, %62 : vector<8x896xi1>
    %c0_15 = arith.constant 0 : index
    %c0_16 = arith.constant 0 : index
    %64 = vector.load %arg7[%c0_15, %c0_16] : memref<1x896xf32, #tpu.memory_space<vmem>>, vector<1x896xf32>
    %65 = vector.broadcast %64 : vector<1x896xf32> to vector<8x896xf32>
    %66 = arith.subf %0, %65 : vector<8x896xf32>
    %cst_17 = arith.constant 0.000000e+00 : f32
    %67 = vector.broadcast %cst_17 : f32 to vector<8x896xf32>
    %68 = arith.select %63, %67, %66 : vector<8x896xi1>, vector<8x896xf32>
    %cst_18 = arith.constant 8.000000e+00 : f32
    %69 = vector.broadcast %cst_18 : f32 to vector<1x1xf32>
    %70 = arith.extui %56 : vector<8x1xi1> to vector<8x1xi32>
    %71 = arith.sitofp %70 : vector<8x1xi32> to vector<8x1xf32>
    %cst_19 = arith.constant dense<0.000000e+00> : vector<1xf32>
    %72 = vector.multi_reduction <add>, %71, %cst_19 [0] : vector<8x1xf32> to vector<1xf32>
    %73 = vector.shape_cast %72 : vector<1xf32> to vector<1x1xf32>
    %74 = arith.subf %69, %73 : vector<1x1xf32>
    %75 = arith.extui %51 : vector<8x1xi1> to vector<8x1xi32>
    %76 = arith.sitofp %75 : vector<8x1xi32> to vector<8x1xf32>
    %cst_20 = arith.constant dense<0.000000e+00> : vector<1xf32>
    %77 = vector.multi_reduction <add>, %76, %cst_20 [0] : vector<8x1xf32> to vector<1xf32>
    %78 = vector.shape_cast %77 : vector<1xf32> to vector<1x1xf32>
    %79 = arith.subf %69, %78 : vector<1x1xf32>
    %c0_21 = arith.constant 0 : index
    %c0_22 = arith.constant 0 : index
    %80 = vector.load %arg4[%c0_21, %c0_22] : memref<1x896xf32, #tpu.memory_space<vmem>>, vector<1x896xf32>
    %81 = vector.shape_cast %79 : vector<1x1xf32> to vector<1x1xf32>
    %82 = vector.broadcast %81 : vector<1x1xf32> to vector<1x896xf32>
    %83 = vector.shape_cast %69 : vector<1x1xf32> to vector<1x1xf32>
    %84 = vector.broadcast %83 : vector<1x1xf32> to vector<1x896xf32>
    %85 = arith.select %14, %82, %84 : vector<1x896xi1>, vector<1x896xf32>
    %86 = vector.shape_cast %74 : vector<1x1xf32> to vector<1x1xf32>
    %87 = vector.broadcast %86 : vector<1x1xf32> to vector<1x896xf32>
    %88 = arith.select %9, %87, %85 : vector<1x896xi1>, vector<1x896xf32>
    %89 = arith.addf %80, %88 : vector<1x896xf32>
    %c0_23 = arith.constant 0 : index
    %c0_24 = arith.constant 0 : index
    %90 = vector.load %arg4[%c0_23, %c0_24] : memref<1x896xf32, #tpu.memory_space<vmem>>, vector<1x896xf32>
    tpu.vector_store %arg4[%c0_23, %c0_24], %89 {strides = array<i32>} : memref<1x896xf32, #tpu.memory_space<vmem>>, vector<1x896xf32>,
    %c0_25 = arith.constant 0 : index
    %c0_26 = arith.constant 0 : index
    %91 = vector.load %arg5[%c0_25, %c0_26] : memref<1x896xf32, #tpu.memory_space<vmem>>, vector<1x896xf32>
    %cst_27 = arith.constant dense<0.000000e+00> : vector<896xf32>
    %92 = vector.multi_reduction <add>, %68, %cst_27 [0] : vector<8x896xf32> to vector<896xf32>
    %93 = vector.shape_cast %92 : vector<896xf32> to vector<1x896xf32>
    %94 = arith.addf %91, %93 : vector<1x896xf32>
    %c0_28 = arith.constant 0 : index
    %c0_29 = arith.constant 0 : index
    %95 = vector.load %arg5[%c0_28, %c0_29] : memref<1x896xf32, #tpu.memory_space<vmem>>, vector<1x896xf32>
    tpu.vector_store %arg5[%c0_28, %c0_29], %94 {strides = array<i32>} : memref<1x896xf32, #tpu.memory_space<vmem>>, vector<1x896xf32>,
    %c0_30 = arith.constant 0 : index
    %c0_31 = arith.constant 0 : index
    %96 = vector.load %arg6[%c0_30, %c0_31] : memref<1x896xf32, #tpu.memory_space<vmem>>, vector<1x896xf32>
    %97 = arith.mulf %68, %68 : vector<8x896xf32>
    %cst_32 = arith.constant dense<0.000000e+00> : vector<896xf32>
    %98 = vector.multi_reduction <add>, %97, %cst_32 [0] : vector<8x896xf32> to vector<896xf32>
    %99 = vector.shape_cast %98 : vector<896xf32> to vector<1x896xf32>
    %100 = arith.addf %96, %99 : vector<1x896xf32>
    %c0_33 = arith.constant 0 : index
    %c0_34 = arith.constant 0 : index
    %101 = vector.load %arg6[%c0_33, %c0_34] : memref<1x896xf32, #tpu.memory_space<vmem>>, vector<1x896xf32>
    tpu.vector_store %arg6[%c0_33, %c0_34], %100 {strides = array<i32>} : memref<1x896xf32, #tpu.memory_space<vmem>>, vector<1x896xf32>,
    %c0_i32_35 = arith.constant 0 : i32
    %102 = arith.cmpi eq, %arg1, %c0_i32_35 : i32
    %103 = arith.extui %102 : i1 to i32
    %c0_i32_36 = arith.constant 0 : i32
    %104 = arith.cmpi ne, %103, %c0_i32_36 : i32
    scf.if %104 {
      %c0_37 = arith.constant 0 : index
      %c0_38 = arith.constant 0 : index
      %105 = vector.load %arg4[%c0_37, %c0_38] : memref<1x896xf32, #tpu.memory_space<vmem>>, vector<1x896xf32>
      %c0_39 = arith.constant 0 : index
      %c0_40 = arith.constant 0 : index
      %106 = vector.load %arg5[%c0_39, %c0_40] : memref<1x896xf32, #tpu.memory_space<vmem>>, vector<1x896xf32>
      %107 = arith.divf %106, %105 : vector<1x896xf32>
      %c0_41 = arith.constant 0 : index
      %c0_42 = arith.constant 0 : index
      %108 = vector.load %arg7[%c0_41, %c0_42] : memref<1x896xf32, #tpu.memory_space<vmem>>, vector<1x896xf32>
      %109 = arith.addf %107, %108 : vector<1x896xf32>
      %c0_43 = arith.constant 0 : index
      %c0_44 = arith.constant 0 : index
      %110 = vector.load %arg6[%c0_43, %c0_44] : memref<1x896xf32, #tpu.memory_space<vmem>>, vector<1x896xf32>
      %111 = arith.mulf %105, %107 : vector<1x896xf32>
      %112 = arith.mulf %111, %107 : vector<1x896xf32>
      %113 = arith.subf %110, %112 : vector<1x896xf32>
      %cst_45 = arith.constant 1.000000e+00 : f32
      %114 = vector.broadcast %cst_45 : f32 to vector<1x896xf32>
      %115 = arith.subf %105, %114 : vector<1x896xf32>
      %116 = arith.divf %113, %115 : vector<1x896xf32>
      %cst_46 = arith.constant 0.000000e+00 : f32
      %117 = vector.broadcast %cst_46 : f32 to vector<1x896xf32>
      %118 = arith.maximumf %116, %117 : vector<1x896xf32>
      %119 = math.sqrt %118 : vector<1x896xf32>
      %120 = arith.cmpf one, %109, %109 : vector<1x896xf32>
      %cst_47 = arith.constant 0.000000e+00 : f32
      %121 = vector.broadcast %cst_47 : f32 to vector<1x896xf32>
      %122 = arith.select %120, %121, %109 : vector<1x896xi1>, vector<1x896xf32>
      %c0_48 = arith.constant 0 : index
      %c0_49 = arith.constant 0 : index
      %123 = vector.load %arg3[%c0_48, %c0_49] : memref<2x896xf32, #tpu.memory_space<vmem>>, vector<1x896xf32>
      tpu.vector_store %arg3[%c0_48, %c0_49], %122 {strides = array<i32>} : memref<2x896xf32, #tpu.memory_space<vmem>>, vector<1x896xf32>,
      %124 = arith.cmpf one, %119, %119 : vector<1x896xf32>
      %cst_50 = arith.constant 0.000000e+00 : f32
      %125 = vector.broadcast %cst_50 : f32 to vector<1x896xf32>
      %126 = arith.select %124, %125, %119 : vector<1x896xi1>, vector<1x896xf32>
      %c1 = arith.constant 1 : index
      %c0_51 = arith.constant 0 : index
      %127 = vector.load %arg3[%c1, %c0_51] : memref<2x896xf32, #tpu.memory_space<vmem>>, vector<1x896xf32>
      tpu.vector_store %arg3[%c1, %c0_51], %126 {strides = array<i32>} : memref<2x896xf32, #tpu.memory_space<vmem>>, vector<1x896xf32>,
    } else {
    }
    return
  }
  func.func @transform_0(%arg0: i32, %arg1: i32) -> (i32, i32) {
    %c0_i32 = arith.constant 0 : i32
    return %arg1, %arg0 : i32, i32
  }
  func.func @transform_1(%arg0: i32, %arg1: i32) -> (i32, i32) {
    %c0_i32 = arith.constant 0 : i32
    %c0_i32_0 = arith.constant 0 : i32
    return %c0_i32, %arg0 : i32, i32
  }
}

</mosaic_0001>

<llo_original>
// kernel: tpu_custom_call.1
$region0: #{tpu_custom_call.1}
  #allocation0 [shape = 'u32[]', space=smem, size = 0x4, offset = 0x4, fixed_abs, tag = 'smem constant byte address 0x4 - core index']
  #allocation1 [shape = 'u32[144,128]{1,0:T(1,128)}', space=vmem, size = 0x12000, scoped, tag = 'internal scratch']
  #allocation2 [shape = 'f32[1,896]{1,0:T(1,128)}', space=vmem, size = 0xe00, scoped, tag = 'scratch operand']
  #allocation3 [shape = 'f32[1,896]{1,0:T(1,128)}', space=vmem, size = 0xe00, scoped, tag = 'scratch operand']
  #allocation4 [shape = 'f32[1,896]{1,0:T(1,128)}', space=vmem, size = 0xe00, scoped, tag = 'scratch operand']
  #allocation5 [shape = 'f32[1,896]{1,0:T(1,128)}', space=vmem, size = 0xe00, scoped, tag = 'scratch operand']
  %s0 = inlined_call_operand.hbm [shape: f32[8,1629], index: 0, kind: input, shape index: {}]
  %s1 = inlined_call_operand.hbm [shape: f32[2,1792], index: 1, kind: output, shape index: {}]
  %s2 = sld [smem:[#allocation0]]
  $region49: #{tpu_custom_call.1} parent=0
    _
  %s4 = ssub.s32 1, %s2
  %s5 = scalar_select 0, %s4, %s2
  $region1: #{tpu_custom_call.1} parent=0
    #allocation6 [shape = 'u8[57344]{0}', space=vmem, size = 0xe000, scoped, tag = 'input window, operand 0']
    #allocation7 [shape = 's32[2]{0}', space=sflag, size = 0x8, scoped, tag = 'scoped memory for tpu_custom_call.1']
    #allocation8 [shape = 's32[2]{0}', space=sflag, size = 0x8, scoped, tag = 'scoped memory for tpu_custom_call.1']
    #allocation9 [shape = 'u8[14336]{0}', space=vmem, size = 0x3800, scoped, tag = 'output window, operand 0']
    %6 = vsyncpa [#allocation7], 0
    %s7 = scalar_lea.sflag [#allocation7], 1
    %8 = vsyncpa %s7, 0
    %9 = vsyncpa [#allocation8], 0
    %s10 = scalar_lea.sflag [#allocation8], 1
    %11 = vsyncpa %s10, 0
    loop: start=0, step=1, limit=4
    $region2: #{tpu_custom_call.1} parent=1 // loop_pre_header
      _
    $region3: #{tpu_custom_call.1} parent=1 // loop_header
      %s13 = sphi 0, %s17
      %p14 = scmp.ge.s32.totalorder %s13, 4
      %s20 = sphi 0, %s32
      %s21 = sphi 0, %s28
      %s22 = sphi 0, %s20
      %s23 = sphi 0, %s21
      %s24 = sphi 0, %s22
      %s25 = sphi 0, %s23
      %s37 = sphi 0, %s39
      %s40 = sphi 0, %s37
      %s41 = sphi 0, %s40
      %s57 = sphi 0, %s41
      %s63 = sphi 0, %s65
      %s66 = sphi 0, %s63
      %s67 = sphi 0, %s66
      %s83 = sphi 0, %s67
    $region4: #{tpu_custom_call.1} parent=1 // loop_header_branch
      %16 = sbr.rel (%p14) target = $region8
    $region5: #{tpu_custom_call.1} parent=1 // loop_body
      %s18 = ssub.s32 %s13, 1
      %s19 = ssub.s32 %s13, 2
      %s26 = sadd.s32 1, %s21
      %p27 = scmp.ge.s32.totalorder %s26, 1
      %s28 = scalar_select %p27, 0, %s26
      %s29 = sadd.s32 1, %s20
      %s30 = scalar_select %p27, %s29, %s20
      %p31 = scmp.ge.s32.totalorder %s30, 2
      %s32 = scalar_select %p31, 0, %s30
      %s33 = ssub.s32 %s21, %s28
      %s34 = ssub.s32 %s20, %s32
      %s35 = sor.u32 %s33, %s34
      %p36 = scmp.eq.s32.totalorder %s35, 0
      %s38 = sadd.s32 %s37, 1
      %s39 = scalar_select %p36, %s37, %s38
      %p42 = pneg %p36
      %p43 = scmp.eq.s32.totalorder %s13, 1
      %p44 = por %p42, %p43
      %p45 = scmp.ne.s32.totalorder %s37, %s40
      %p46 = scmp.eq.s32.totalorder %s13, 0
      %p47 = por %p45, %p46
      %p48 = scmp.ne.s32.totalorder %s37, %s40
      %p49 = scmp.eq.s32.totalorder %s18, 1
      %p50 = por %p48, %p49
      %p51 = scmp.ne.s32.totalorder %s40, %s41
      %p52 = scmp.eq.s32.totalorder %s18, 0
      %p53 = por %p51, %p52
      %p54 = scmp.ne.s32.totalorder %s40, %s41
      %p55 = scmp.eq.s32.totalorder %s19, 1
      %p56 = por %p54, %p55
      %p58 = scmp.ne.s32.totalorder %s41, %s57
      %p59 = scmp.eq.s32.totalorder %s19, 0
      %p60 = por %p58, %p59
      %s61 = ssub.s32 %s20, %s32
      %p62 = scmp.eq.s32.totalorder %s61, 0
      %s64 = sadd.s32 %s63, 1
      %s65 = scalar_select %p62, %s63, %s64
      %p68 = pneg %p62
      %p69 = scmp.eq.s32.totalorder %s13, 1
      %p70 = por %p68, %p69
      %p71 = scmp.ne.s32.totalorder %s63, %s66
      %p72 = scmp.eq.s32.totalorder %s13, 0
      %p73 = por %p71, %p72
      %p74 = scmp.ne.s32.totalorder %s63, %s66
      %p75 = scmp.eq.s32.totalorder %s18, 1
      %p76 = por %p74, %p75
      %p77 = scmp.ne.s32.totalorder %s66, %s67
      %p78 = scmp.eq.s32.totalorder %s18, 0
      %p79 = por %p77, %p78
      %p80 = scmp.ne.s32.totalorder %s66, %s67
      %p81 = scmp.eq.s32.totalorder %s19, 1
      %p82 = por %p80, %p81
      %p84 = scmp.ne.s32.totalorder %s67, %s83
      %p85 = scmp.eq.s32.totalorder %s19, 0
      %p86 = por %p84, %p85
      %p87 = scmp.le.s32.totalorder 1, %s13
      %p88 = scmp.lt.s32.totalorder %s13, 3
      %p89 = pnand %p87, %p88
      %p90 = pneg %p89
      // Predicated region
      $region9: #{tpu_custom_call.1} parent=5 // pred_check
        _
      $region10: #{tpu_custom_call.1} parent=5 // pred_check_branch
        %92 = sbr.rel (%p89) target = $region12
      $region11: #{tpu_custom_call.1} parent=5 // pred_region
        %s93 = ssub.s32 %s13, 1
      $region12: #{tpu_custom_call.1} parent=5 // pred_fallthru
        _
      %p94 = scmp.lt.s32.totalorder %s13, 2
      // Predicated region
      $region13: #{tpu_custom_call.1} parent=5 // pred_check
        %p95 = pneg %p94
      $region14: #{tpu_custom_call.1} parent=5 // pred_check_branch
        %97 = sbr.rel (%p95) target = $region16
      $region15: #{tpu_custom_call.1} parent=5 // pred_region
        // Predicated region
        $region17: #{tpu_custom_call.1} parent=15 // pred_check
          %p98 = pneg %p47
        $region18: #{tpu_custom_call.1} parent=15 // pred_check_branch
          %100 = sbr.rel (%p98) target = $region20
        $region19: #{tpu_custom_call.1} parent=15 // pred_region
          %s101 = sand.u32 %s37, 1
          %s102 = scalar_lea.sflag [#allocation7], %s101
          %s103 = sand.u32 %s37, 1
          %s104 = smul.addr %s103, 56
          %s105 = scalar_lea.vmem [#allocation6], %s104
          %s106 = smul.u32 7, %s20
          %s107 = ssub.s32 13, %s106
          %p108 = scmp.lt.s32.totalorder %s107, 7
          %s109 = scalar_select %p108, %s107, 7
          %s110 = smul.u32 128, %s109
          %s112 = ssub.s32 896, %s110
          %113 = vsyncadd %s102, %s112
          %p114 = scmp.ne.s32.totalorder 0, %s110
          %s115 = smul.addr %s21, 13
          %s116 = sadd.s32 %s106, %s115
          %s117 = smul.addr %s116, 128
          %s118 = scalar_lea.hbm %s0, %s117
          %s119 = smul.u32 %s109, 8
          %s120 = sshll.u32 %s119, 4
          %s121 = sshll.u32 %s105, 4
          %s122 = int_to_ptr.vmem [resolvable:$true] %s121
          %124 = dma.hbm_to_vmem [thread:$0]  (%p114), %s118, %s120, %s122, %s102
        $region20: #{tpu_custom_call.1} parent=15 // pred_fallthru
          _
      $region16: #{tpu_custom_call.1} parent=5 // pred_fallthru
        _
      %p125 = scmp.le.s32.totalorder 1, %s13
      %p126 = scmp.lt.s32.totalorder %s13, 3
      %p127 = pnand %p125, %p126
      %p128 = pneg %p127
      // Predicated region
      $region21: #{tpu_custom_call.1} parent=5 // pred_check
        _
      $region22: #{tpu_custom_call.1} parent=5 // pred_check_branch
        %130 = sbr.rel (%p127) target = $region24
      $region23: #{tpu_custom_call.1} parent=5 // pred_region
        %s131 = ssub.s32 %s13, 1
        %s132 = sand.u32 %s40, 1
        %s133 = scalar_lea.sflag [#allocation7], %s132
        %s134 = sand.u32 %s40, 1
        %s135 = smul.addr %s134, 56
        %s136 = scalar_lea.vmem [#allocation6], %s135
        // Predicated region
        $region25: #{tpu_custom_call.1} parent=23 // pred_check
          %p137 = pneg %p53
        $region26: #{tpu_custom_call.1} parent=23 // pred_check_branch
          %139 = sbr.rel (%p137) target = $region28
        $region27: #{tpu_custom_call.1} parent=23 // pred_region
          %140 = dma.done %s133, 896
        $region28: #{tpu_custom_call.1} parent=23 // pred_fallthru
          _
        %s141 = sand.u32 %s40, 1
        %s142 = scalar_lea.sflag [#allocation7], %s141
        %s143 = sand.u32 %s40, 1
        %s144 = smul.addr %s143, 56
        %s145 = scalar_lea.vmem [#allocation6], %s144
        %p146 = pneg %p53
        %p147 = pneg %p50
        %p148 = pneg %p79
        %p149 = pneg %p76
        %s150 = sand.u32 %s66, 1
        %s151 = scalar_lea.sflag [#allocation8], %s150
        %s152 = sand.u32 %s66, 1
        %s153 = smul.addr %s152, 14
        %s154 = scalar_lea.vmem [#allocation9], %s153
        %s155 = smul.u32 7, %s22
        %s156 = ssub.s32 13, %s155
        %p157 = scmp.lt.s32.totalorder %s156, 7
        %s158 = scalar_select %p157, %s156, 7
        %s159 = smul.u32 128, %s158
        %s160 = smul.u32 7, %s22
        %v161 = vld [vmem:[%s136] sm:$0xff]
        %v162 = vld [vmem:[%s136 + $0x8] sm:$0xff]
        %v163 = vld [vmem:[%s136 + $0x10] sm:$0xff]
        %v164 = vld [vmem:[%s136 + $0x18] sm:$0xff]
        %v165 = vld [vmem:[%s136 + $0x20] sm:$0xff]
        %v166 = vld [vmem:[%s136 + $0x28] sm:$0xff]
        %v167 = vld [vmem:[%s136 + $0x30] sm:$0xff]
        %s168 = smul.u32 %s22, 896
        %v169 = vlaneseq
        %v170 = vand.u32 %v169, 127
        %v171 = vadd.s32 %v170, 128
        %v172 = vadd.s32 %v170, 256
        %v173 = vadd.s32 %v170, 384
        %v174 = vadd.s32 %v170, 512
        %v175 = vadd.s32 %v170, 640
        %v176 = vadd.s32 %v170, 768
        %v177 = vstv %s168
        %v178 = vadd.s32 %v170, %v177
        %v179 = vadd.s32 %v171, %v177
        %v180 = vadd.s32 %v172, %v177
        %v181 = vadd.s32 %v173, %v177
        %v182 = vadd.s32 %v174, %v177
        %v183 = vadd.s32 %v175, %v177
        %v184 = vadd.s32 %v176, %v177
        %vm185 = vcmp.ge.s32.totalorder %v178, 1404
        %vm186 = vcmp.ge.s32.totalorder %v179, 1404
        %vm187 = vcmp.ge.s32.totalorder %v180, 1404
        %vm188 = vcmp.ge.s32.totalorder %v181, 1404
        %vm189 = vcmp.ge.s32.totalorder %v182, 1404
        %vm190 = vcmp.ge.s32.totalorder %v183, 1404
        %vm191 = vcmp.ge.s32.totalorder %v184, 1404
        %vm192 = vcmp.lt.s32.totalorder %v178, 1467
        %vm193 = vcmp.lt.s32.totalorder %v179, 1467
        %vm194 = vcmp.lt.s32.totalorder %v180, 1467
        %vm195 = vcmp.lt.s32.totalorder %v181, 1467
        %vm196 = vcmp.lt.s32.totalorder %v182, 1467
        %vm197 = vcmp.lt.s32.totalorder %v183, 1467
        %vm198 = vcmp.lt.s32.totalorder %v184, 1467
        %vm199 = vmand %vm185, %vm192
        %vm200 = vmand %vm186, %vm193
        %vm201 = vmand %vm187, %vm194
        %vm202 = vmand %vm188, %vm195
        %vm203 = vmand %vm189, %vm196
        %vm204 = vmand %vm190, %vm197
        %vm205 = vmand %vm191, %vm198
        %vm206 = vcmp.ge.s32.totalorder %v178, 1566
        %vm207 = vcmp.ge.s32.totalorder %v179, 1566
        %vm208 = vcmp.ge.s32.totalorder %v180, 1566
        %vm209 = vcmp.ge.s32.totalorder %v181, 1566
        %vm210 = vcmp.ge.s32.totalorder %v182, 1566
        %vm211 = vcmp.ge.s32.totalorder %v183, 1566
        %vm212 = vcmp.ge.s32.totalorder %v184, 1566
        %vm213 = vcmp.lt.s32.totalorder %v178, 1629
        %vm214 = vcmp.lt.s32.totalorder %v179, 1629
        %vm215 = vcmp.lt.s32.totalorder %v180, 1629
        %vm216 = vcmp.lt.s32.totalorder %v181, 1629
        %vm217 = vcmp.lt.s32.totalorder %v182, 1629
        %vm218 = vcmp.lt.s32.totalorder %v183, 1629
        %vm219 = vcmp.lt.s32.totalorder %v184, 1629
        %vm220 = vmand %vm206, %vm213
        %vm221 = vmand %vm207, %vm214
        %vm222 = vmand %vm208, %vm215
        %vm223 = vmand %vm209, %vm216
        %vm224 = vmand %vm210, %vm217
        %vm225 = vmand %vm211, %vm218
        %vm226 = vmand %vm212, %vm219
        %p227 = scmp.eq.s32.totalorder %s23, 0
        // Predicated region
        $region29: #{tpu_custom_call.1} parent=23 // pred_check
          %p228 = pneg %p227
        $region30: #{tpu_custom_call.1} parent=23 // pred_check_branch
          %230 = sbr.rel (%p228) target = $region32
        $region31: #{tpu_custom_call.1} parent=23 // pred_region
          %v231 = vlaneseq
          %vm232 = vcmp.ge.s32.totalorder %v231, 0
          %vm233 = vcmp.lt.s32.totalorder %v231, 896
          %vm234 = vmand %vm232, %vm233
          %235 = vst.msk [vmem:[#allocation2] sm:$0x7f] %vm234, 0.0
          %236 = vst.msk [vmem:[#allocation3] sm:$0x7f] %vm234, 0.0
          %237 = vst.msk [vmem:[#allocation4] sm:$0x7f] %vm234, 0.0
          %vm238 = vcmp.ne.f32.partialorder %v161, %v161
          %vm239 = vcmp.ne.f32.partialorder %v162, %v162
          %vm240 = vcmp.ne.f32.partialorder %v163, %v163
          %vm241 = vcmp.ne.f32.partialorder %v164, %v164
          %vm242 = vcmp.ne.f32.partialorder %v165, %v165
          %vm243 = vcmp.ne.f32.partialorder %v166, %v166
          %vm244 = vcmp.ne.f32.partialorder %v167, %v167
          %v245 = vsel %vm238, 0.0, %v161
          %v246 = vsel %vm239, 0.0, %v162
          %v247 = vsel %vm240, 0.0, %v163
          %v248 = vsel %vm241, 0.0, %v164
          %v249 = vsel %vm242, 0.0, %v165
          %v250 = vsel %vm243, 0.0, %v166
          %v251 = vsel %vm244, 0.0, %v167
          %v259 = vcombine.low %v245, %v246
          %v260 = vcombine.low %v247, %v248
          %v261 = vcombine.low %v249, %v250
          %v263 = vunpack.c.l.s4 1966171168
          %v264 = vunpack.c.0.s8 %v263
          %v265 = vlaneseq
          %v266 = vshrl.u32 %v265, 7
          %v267 = vsub.s32 %v264, %v266
          %v268 = vrot.slane %v259, %v267
          %v270 = vunpack.c.l.s4 1966171168
          %v271 = vunpack.c.0.s8 %v270
          %v272 = vlaneseq
          %v273 = vshrl.u32 %v272, 7
          %v274 = vsub.s32 %v271, %v273
          %v275 = vrot.slane %v260, %v274
          %v277 = vunpack.c.l.s4 1966171168
          %v278 = vunpack.c.0.s8 %v277
          %v279 = vlaneseq
          %v280 = vshrl.u32 %v279, 7
          %v281 = vsub.s32 %v278, %v280
          %v282 = vrot.slane %v261, %v281
          %v284 = vunpack.c.l.s4 1966171168
          %v285 = vunpack.c.0.s8 %v284
          %v286 = vlaneseq
          %v287 = vshrl.u32 %v286, 7
          %v288 = vsub.s32 %v285, %v287
          %v289 = vrot.slane %v251, %v288
          %v290 = vcombine.low %v268, %v275
          %v291 = vcombine.low %v282, %v289
          %v293 = vunpack.c.l.s4 1966171168
          %v294 = vunpack.c.0.s8 %v293
          %v295 = vlaneseq
          %v296 = vshrl.u32 %v295, 7
          %v297 = vsub.s32 %v294, %v296
          %v298 = vrot.slane %v290, %v297
          %v300 = vunpack.c.l.s4 1966171168
          %v301 = vunpack.c.0.s8 %v300
          %v302 = vlaneseq
          %v303 = vshrl.u32 %v302, 7
          %v304 = vsub.s32 %v301, %v303
          %v305 = vrot.slane %v291, %v304
          %v306 = vcombine.low %v298, %v305
          %308 = vst.msk [vmem:[#allocation5] sm:$0x7f] %vm234, %v306
        $region32: #{tpu_custom_call.1} parent=23 // pred_fallthru
          _
        %s309 = sadd.s32 %s168, 384
        %v310 = vstv %s309
        %v311 = vadd.s32 %v170, %v310
        %v312 = vadd.s32 %v171, %v310
        %v313 = vadd.s32 %v172, %v310
        %vm314 = vcmp.ge.s32.totalorder %v311, 1404
        %vm315 = vcmp.ge.s32.totalorder %v312, 1404
        %vm316 = vcmp.ge.s32.totalorder %v313, 1404
        %vm317 = vcmp.lt.s32.totalorder %v311, 1467
        %vm318 = vcmp.lt.s32.totalorder %v312, 1467
        %vm319 = vcmp.lt.s32.totalorder %v313, 1467
        %vm320 = vmand %vm314, %vm317
        %vm321 = vmand %vm315, %vm318
        %vm322 = vmand %vm316, %vm319
        %v323 = vsel %vm320, 1.0, 0.0
        %v324 = vsel %vm321, 1.0, 0.0
        %v325 = vsel %vm322, 1.0, 0.0
        %vm326 = vcmp.ge.s32.totalorder %v311, 1566
        %vm327 = vcmp.ge.s32.totalorder %v312, 1566
        %vm328 = vcmp.ge.s32.totalorder %v313, 1566
        %vm329 = vcmp.lt.s32.totalorder %v311, 1629
        %vm330 = vcmp.lt.s32.totalorder %v312, 1629
        %vm331 = vcmp.lt.s32.totalorder %v313, 1629
        %vm332 = vmand %vm326, %vm329
        %vm333 = vmand %vm327, %vm330
        %vm334 = vmand %vm328, %vm331
        %v335 = vsel %vm332, 65536.0, 0.0
        %v336 = vsel %vm333, 65536.0, 0.0
        %v337 = vsel %vm334, 65536.0, 0.0
        %v338 = vadd.f32 %v323, %v335
        %v339 = vadd.f32 %v324, %v336
        %v340 = vadd.f32 %v325, %v337
        %vm341 = vcmp.ne.f32.partialorder %v164, %v164
        %vm342 = vcmp.ne.f32.partialorder %v165, %v165
        %vm343 = vcmp.ne.f32.partialorder %v166, %v166
        %v344 = vsel %vm341, %v338, 0.0
        %v345 = vsel %vm342, %v339, 0.0
        %v346 = vsel %vm343, %v340, 0.0
        %v347 = vadd.f32 %v344, %v345
        %v348 = vadd.f32 %v347, %v346
        %349 = vadd.xlane.f32.xlu0 %v348
        %v350 = vpop.xlane.xlu0 %349
        %v351 = vmul.f32 %v350, 1.5258789e-05
        %v352 = vfloor.f32 %v351
        %vm353 = vcmp.gt.f32.partialorder %v352, 0.5
        %v354 = vmul.f32 %v352, 65536.0
        %v355 = vsub.f32 %v350, %v354
        %vm356 = vcmp.gt.f32.partialorder %v355, 0.5
        %v357 = vsel %vm199, 1, 0
        %v358 = vsel %vm200, 1, 0
        %v359 = vsel %vm201, 1, 0
        %v360 = vsel %vm202, 1, 0
        %v361 = vsel %vm203, 1, 0
        %v362 = vsel %vm204, 1, 0
        %v363 = vsel %vm205, 1, 0
        %vm364 = vcmp.eq.s32.totalorder %v357, 1
        %vm365 = vcmp.eq.s32.totalorder %v358, 1
        %vm366 = vcmp.eq.s32.totalorder %v359, 1
        %vm367 = vcmp.eq.s32.totalorder %v360, 1
        %vm368 = vcmp.eq.s32.totalorder %v361, 1
        %vm369 = vcmp.eq.s32.totalorder %v362, 1
        %vm370 = vcmp.eq.s32.totalorder %v363, 1
        %v371 = vsel %vm356, 1, 0
        %vm372 = vcmp.eq.s32.totalorder %v371, 1
        %vm373 = vmand %vm364, %vm372
        %vm374 = vmand %vm365, %vm372
        %vm375 = vmand %vm366, %vm372
        %vm376 = vmand %vm367, %vm372
        %vm377 = vmand %vm368, %vm372
        %vm378 = vmand %vm369, %vm372
        %vm379 = vmand %vm370, %vm372
        %v380 = vsel %vm220, 1, 0
        %v381 = vsel %vm221, 1, 0
        %v382 = vsel %vm222, 1, 0
        %v383 = vsel %vm223, 1, 0
        %v384 = vsel %vm224, 1, 0
        %v385 = vsel %vm225, 1, 0
        %v386 = vsel %vm226, 1, 0
        %vm387 = vcmp.eq.s32.totalorder %v380, 1
        %vm388 = vcmp.eq.s32.totalorder %v381, 1
        %vm389 = vcmp.eq.s32.totalorder %v382, 1
        %vm390 = vcmp.eq.s32.totalorder %v383, 1
        %vm391 = vcmp.eq.s32.totalorder %v384, 1
        %vm392 = vcmp.eq.s32.totalorder %v385, 1
        %vm393 = vcmp.eq.s32.totalorder %v386, 1
        %v394 = vsel %vm353, 1, 0
        %vm395 = vcmp.eq.s32.totalorder %v394, 1
        %vm396 = vmand %vm387, %vm395
        %vm397 = vmand %vm388, %vm395
        %vm398 = vmand %vm389, %vm395
        %vm399 = vmand %vm390, %vm395
        %vm400 = vmand %vm391, %vm395
        %vm401 = vmand %vm392, %vm395
        %vm402 = vmand %vm393, %vm395
        %vm403 = vmor %vm373, %vm396
        %vm404 = vmor %vm374, %vm397
        %vm405 = vmor %vm375, %vm398
        %vm406 = vmor %vm376, %vm399
        %vm407 = vmor %vm377, %vm400
        %vm408 = vmor %vm378, %vm401
        %vm409 = vmor %vm379, %vm402
        %v410 = vld [vmem:[#allocation5] sm:$0xff]
        %v412 = vlaneseq
        %v413 = vshrl.u32 %v412, 7
        %v414 = vsub.s32 0, %v413
        %v415 = vrot.slane %v410, %v414
        %v416 = vlaneseq
        %v417 = vshrl.u32 %v416, 7
        %v418 = vsub.s32 1, %v417
        %v419 = vrot.slane %v410, %v418
        %v420 = vlaneseq
        %v421 = vshrl.u32 %v420, 7
        %v422 = vsub.s32 2, %v421
        %v423 = vrot.slane %v410, %v422
        %v424 = vlaneseq
        %v425 = vshrl.u32 %v424, 7
        %v426 = vsub.s32 3, %v425
        %v427 = vrot.slane %v410, %v426
        %v428 = vlaneseq
        %v429 = vshrl.u32 %v428, 7
        %v430 = vsub.s32 4, %v429
        %v431 = vrot.slane %v410, %v430
        %v432 = vlaneseq
        %v433 = vshrl.u32 %v432, 7
        %v434 = vsub.s32 5, %v433
        %v435 = vrot.slane %v410, %v434
        %v436 = vlaneseq
        %v437 = vshrl.u32 %v436, 7
        %v438 = vsub.s32 6, %v437
        %v439 = vrot.slane %v410, %v438
        %v447 = vsub.f32 %v161, %v415
        %v448 = vsub.f32 %v162, %v419
        %v449 = vsub.f32 %v163, %v423
        %v450 = vsub.f32 %v164, %v427
        %v451 = vsub.f32 %v165, %v431
        %v452 = vsub.f32 %v166, %v435
        %v453 = vsub.f32 %v167, %v439
        %v454 = vsel %vm403, 0.0, %v447
        %v455 = vsel %vm404, 0.0, %v448
        %v456 = vsel %vm405, 0.0, %v449
        %v457 = vsel %vm406, 0.0, %v450
        %v458 = vsel %vm407, 0.0, %v451
        %v459 = vsel %vm408, 0.0, %v452
        %v460 = vsel %vm409, 0.0, %v453
        %v461 = vcvt.s32.f32 %v371
        %v462 = vrot.slane %v461, 4
        %v463 = vadd.f32 %v461, %v462
        %v464 = vrot.slane %v463, 2
        %v465 = vadd.f32 %v463, %v464
        %v466 = vrot.slane %v465, 1
        %v467 = vadd.f32 %v465, %v466
        %v468 = vsub.f32 8.0, %v467
        %v469 = vcvt.s32.f32 %v394
        %v470 = vrot.slane %v469, 4
        %v471 = vadd.f32 %v469, %v470
        %v472 = vrot.slane %v471, 2
        %v473 = vadd.f32 %v471, %v472
        %v474 = vrot.slane %v473, 1
        %v475 = vadd.f32 %v473, %v474
        %v476 = vsub.f32 8.0, %v475
        %v477 = vld [vmem:[#allocation2] sm:$0xff]
        %v478 = vsel %vm220, %v476, 8.0
        %v479 = vsel %vm221, %v476, 8.0
        %v480 = vsel %vm222, %v476, 8.0
        %v481 = vsel %vm223, %v476, 8.0
        %v482 = vsel %vm224, %v476, 8.0
        %v483 = vsel %vm225, %v476, 8.0
        %v484 = vsel %vm226, %v476, 8.0
        %v485 = vsel %vm199, %v468, %v478
        %v486 = vsel %vm200, %v468, %v479
        %v487 = vsel %vm201, %v468, %v480
        %v488 = vsel %vm202, %v468, %v481
        %v489 = vsel %vm203, %v468, %v482
        %v490 = vsel %vm204, %v468, %v483
        %v491 = vsel %vm205, %v468, %v484
        %v499 = vcombine.low %v485, %v486
        %v500 = vcombine.low %v487, %v488
        %v501 = vcombine.low %v489, %v490
        %v503 = vunpack.c.l.s4 1966171168
        %v504 = vunpack.c.0.s8 %v503
        %v505 = vlaneseq
        %v506 = vshrl.u32 %v505, 7
        %v507 = vsub.s32 %v504, %v506
        %v508 = vrot.slane %v499, %v507
        %v510 = vunpack.c.l.s4 1966171168
        %v511 = vunpack.c.0.s8 %v510
        %v512 = vlaneseq
        %v513 = vshrl.u32 %v512, 7
        %v514 = vsub.s32 %v511, %v513
        %v515 = vrot.slane %v500, %v514
        %v517 = vunpack.c.l.s4 1966171168
        %v518 = vunpack.c.0.s8 %v517
        %v519 = vlaneseq
        %v520 = vshrl.u32 %v519, 7
        %v521 = vsub.s32 %v518, %v520
        %v522 = vrot.slane %v501, %v521
        %v524 = vunpack.c.l.s4 1966171168
        %v525 = vunpack.c.0.s8 %v524
        %v526 = vlaneseq
        %v527 = vshrl.u32 %v526, 7
        %v528 = vsub.s32 %v525, %v527
        %v529 = vrot.slane %v491, %v528
        %v530 = vcombine.low %v508, %v515
        %v531 = vcombine.low %v522, %v529
        %v533 = vunpack.c.l.s4 1966171168
        %v534 = vunpack.c.0.s8 %v533
        %v535 = vlaneseq
        %v536 = vshrl.u32 %v535, 7
        %v537 = vsub.s32 %v534, %v536
        %v538 = vrot.slane %v530, %v537
        %v540 = vunpack.c.l.s4 1966171168
        %v541 = vunpack.c.0.s8 %v540
        %v542 = vlaneseq
        %v543 = vshrl.u32 %v542, 7
        %v544 = vsub.s32 %v541, %v543
        %v545 = vrot.slane %v531, %v544
        %v546 = vcombine.low %v538, %v545
        %v548 = vadd.f32 %v477, %v546
        %v549 = vlaneseq
        %vm550 = vcmp.ge.s32.totalorder %v549, 0
        %vm551 = vcmp.lt.s32.totalorder %v549, 896
        %vm552 = vmand %vm550, %vm551
        %553 = vst.msk [vmem:[#allocation2] sm:$0x7f] %vm552, %v548
        %v554 = vld [vmem:[#allocation3] sm:$0xff]
        %v555 = vrot.slane %v454, 4
        %v556 = vadd.f32 %v454, %v555
        %v557 = vrot.slane %v556, 2
        %v558 = vadd.f32 %v556, %v557
        %v559 = vrot.slane %v558, 1
        %v560 = vadd.f32 %v558, %v559
        %v561 = vrot.slane %v455, 4
        %v562 = vadd.f32 %v455, %v561
        %v563 = vrot.slane %v562, 2
        %v564 = vadd.f32 %v562, %v563
        %v565 = vrot.slane %v564, 1
        %v566 = vadd.f32 %v564, %v565
        %v567 = vrot.slane %v456, 4
        %v568 = vadd.f32 %v456, %v567
        %v569 = vrot.slane %v568, 2
        %v570 = vadd.f32 %v568, %v569
        %v571 = vrot.slane %v570, 1
        %v572 = vadd.f32 %v570, %v571
        %v573 = vrot.slane %v457, 4
        %v574 = vadd.f32 %v457, %v573
        %v575 = vrot.slane %v574, 2
        %v576 = vadd.f32 %v574, %v575
        %v577 = vrot.slane %v576, 1
        %v578 = vadd.f32 %v576, %v577
        %v579 = vrot.slane %v458, 4
        %v580 = vadd.f32 %v458, %v579
        %v581 = vrot.slane %v580, 2
        %v582 = vadd.f32 %v580, %v581
        %v583 = vrot.slane %v582, 1
        %v584 = vadd.f32 %v582, %v583
        %v585 = vrot.slane %v459, 4
        %v586 = vadd.f32 %v459, %v585
        %v587 = vrot.slane %v586, 2
        %v588 = vadd.f32 %v586, %v587
        %v589 = vrot.slane %v588, 1
        %v590 = vadd.f32 %v588, %v589
        %v591 = vrot.slane %v460, 4
        %v592 = vadd.f32 %v460, %v591
        %v593 = vrot.slane %v592, 2
        %v594 = vadd.f32 %v592, %v593
        %v595 = vrot.slane %v594, 1
        %v596 = vadd.f32 %v594, %v595
        %v604 = vcombine.low %v560, %v566
        %v605 = vcombine.low %v572, %v578
        %v606 = vcombine.low %v584, %v590
        %v608 = vunpack.c.l.s4 1966171168
        %v609 = vunpack.c.0.s8 %v608
        %v610 = vlaneseq
        %v611 = vshrl.u32 %v610, 7
        %v612 = vsub.s32 %v609, %v611
        %v613 = vrot.slane %v604, %v612
        %v615 = vunpack.c.l.s4 1966171168
        %v616 = vunpack.c.0.s8 %v615
        %v617 = vlaneseq
        %v618 = vshrl.u32 %v617, 7
        %v619 = vsub.s32 %v616, %v618
        %v620 = vrot.slane %v605, %v619
        %v622 = vunpack.c.l.s4 1966171168
        %v623 = vunpack.c.0.s8 %v622
        %v624 = vlaneseq
        %v625 = vshrl.u32 %v624, 7
        %v626 = vsub.s32 %v623, %v625
        %v627 = vrot.slane %v606, %v626
        %v629 = vunpack.c.l.s4 1966171168
        %v630 = vunpack.c.0.s8 %v629
        %v631 = vlaneseq
        %v632 = vshrl.u32 %v631, 7
        %v633 = vsub.s32 %v630, %v632
        %v634 = vrot.slane %v596, %v633
        %v635 = vcombine.low %v613, %v620
        %v636 = vcombine.low %v627, %v634
        %v638 = vunpack.c.l.s4 1966171168
        %v639 = vunpack.c.0.s8 %v638
        %v640 = vlaneseq
        %v641 = vshrl.u32 %v640, 7
        %v642 = vsub.s32 %v639, %v641
        %v643 = vrot.slane %v635, %v642
        %v645 = vunpack.c.l.s4 1966171168
        %v646 = vunpack.c.0.s8 %v645
        %v647 = vlaneseq
        %v648 = vshrl.u32 %v647, 7
        %v649 = vsub.s32 %v646, %v648
        %v650 = vrot.slane %v636, %v649
        %v651 = vcombine.low %v643, %v650
        %v653 = vadd.f32 %v554, %v651
        %654 = vst.msk [vmem:[#allocation3] sm:$0x7f] %vm552, %v653
        %v655 = vld [vmem:[#allocation4] sm:$0xff]
        %v656 = vmul.f32 %v454, %v454
        %v657 = vmul.f32 %v455, %v455
        %v658 = vmul.f32 %v456, %v456
        %v659 = vmul.f32 %v457, %v457
        %v660 = vmul.f32 %v458, %v458
        %v661 = vmul.f32 %v459, %v459
        %v662 = vmul.f32 %v460, %v460
        %v663 = vrot.slane %v656, 4
        %v664 = vadd.f32 %v656, %v663
        %v665 = vrot.slane %v664, 2
        %v666 = vadd.f32 %v664, %v665
        %v667 = vrot.slane %v666, 1
        %v668 = vadd.f32 %v666, %v667
        %v669 = vrot.slane %v657, 4
        %v670 = vadd.f32 %v657, %v669
        %v671 = vrot.slane %v670, 2
        %v672 = vadd.f32 %v670, %v671
        %v673 = vrot.slane %v672, 1
        %v674 = vadd.f32 %v672, %v673
        %v675 = vrot.slane %v658, 4
        %v676 = vadd.f32 %v658, %v675
        %v677 = vrot.slane %v676, 2
        %v678 = vadd.f32 %v676, %v677
        %v679 = vrot.slane %v678, 1
        %v680 = vadd.f32 %v678, %v679
        %v681 = vrot.slane %v659, 4
        %v682 = vadd.f32 %v659, %v681
        %v683 = vrot.slane %v682, 2
        %v684 = vadd.f32 %v682, %v683
        %v685 = vrot.slane %v684, 1
        %v686 = vadd.f32 %v684, %v685
        %v687 = vrot.slane %v660, 4
        %v688 = vadd.f32 %v660, %v687
        %v689 = vrot.slane %v688, 2
        %v690 = vadd.f32 %v688, %v689
        %v691 = vrot.slane %v690, 1
        %v692 = vadd.f32 %v690, %v691
        %v693 = vrot.slane %v661, 4
        %v694 = vadd.f32 %v661, %v693
        %v695 = vrot.slane %v694, 2
        %v696 = vadd.f32 %v694, %v695
        %v697 = vrot.slane %v696, 1
        %v698 = vadd.f32 %v696, %v697
        %v699 = vrot.slane %v662, 4
        %v700 = vadd.f32 %v662, %v699
        %v701 = vrot.slane %v700, 2
        %v702 = vadd.f32 %v700, %v701
        %v703 = vrot.slane %v702, 1
        %v704 = vadd.f32 %v702, %v703
        %v712 = vcombine.low %v668, %v674
        %v713 = vcombine.low %v680, %v686
        %v714 = vcombine.low %v692, %v698
        %v716 = vunpack.c.l.s4 1966171168
        %v717 = vunpack.c.0.s8 %v716
        %v718 = vlaneseq
        %v719 = vshrl.u32 %v718, 7
        %v720 = vsub.s32 %v717, %v719
        %v721 = vrot.slane %v712, %v720
        %v723 = vunpack.c.l.s4 1966171168
        %v724 = vunpack.c.0.s8 %v723
        %v725 = vlaneseq
        %v726 = vshrl.u32 %v725, 7
        %v727 = vsub.s32 %v724, %v726
        %v728 = vrot.slane %v713, %v727
        %v730 = vunpack.c.l.s4 1966171168
        %v731 = vunpack.c.0.s8 %v730
        %v732 = vlaneseq
        %v733 = vshrl.u32 %v732, 7
        %v734 = vsub.s32 %v731, %v733
        %v735 = vrot.slane %v714, %v734
        %v737 = vunpack.c.l.s4 1966171168
        %v738 = vunpack.c.0.s8 %v737
        %v739 = vlaneseq
        %v740 = vshrl.u32 %v739, 7
        %v741 = vsub.s32 %v738, %v740
        %v742 = vrot.slane %v704, %v741
        %v743 = vcombine.low %v721, %v728
        %v744 = vcombine.low %v735, %v742
        %v746 = vunpack.c.l.s4 1966171168
        %v747 = vunpack.c.0.s8 %v746
        %v748 = vlaneseq
        %v749 = vshrl.u32 %v748, 7
        %v750 = vsub.s32 %v747, %v749
        %v751 = vrot.slane %v743, %v750
        %v753 = vunpack.c.l.s4 1966171168
        %v754 = vunpack.c.0.s8 %v753
        %v755 = vlaneseq
        %v756 = vshrl.u32 %v755, 7
        %v757 = vsub.s32 %v754, %v756
        %v758 = vrot.slane %v744, %v757
        %v759 = vcombine.low %v751, %v758
        %v761 = vadd.f32 %v655, %v759
        %762 = vst.msk [vmem:[#allocation4] sm:$0x7f] %vm552, %v761
        // Predicated region
        $region33: #{tpu_custom_call.1} parent=23 // pred_check
          %p763 = pneg %p227
        $region34: #{tpu_custom_call.1} parent=23 // pred_check_branch
          %765 = sbr.rel (%p763) target = $region36
        $region35: #{tpu_custom_call.1} parent=23 // pred_region
          %v766 = vld [vmem:[#allocation2] sm:$0xff]
          %v767 = vld [vmem:[#allocation3] sm:$0xff]
          %v768 = vrcp.pop %v766
          %v769 = vmul.f32 %v767, %v768
          %v770 = vld [vmem:[#allocation5] sm:$0xff]
          %v771 = vadd.f32 %v769, %v770
          %v772 = vld [vmem:[#allocation4] sm:$0xff]
          %v773 = vmul.f32 %v766, %v769
          %v774 = vmul.f32 %v773, %v769
          %v775 = vsub.f32 %v772, %v774
          %v776 = vsub.f32 %v766, 1.0
          %v777 = vrcp.pop %v776
          %v778 = vmul.f32 %v775, %v777
          %v779 = vmax.f32 %v778, 0.0
          %v780 = vrsqrt.pop %v779
          %v781 = vmul.f32 %v779, %v780
          %vm782 = vcmp.eq.f32.partialorder %v779, inf
          %v783 = vsel %vm782, %v779, %v781
          %vm784 = vcmp.eq.f32.partialorder %v779, 0.0
          %v785 = vand.u32 %v779, 2147483648
          %v786 = vsel %vm784, %v785, %v783
          %vm787 = vcmp.ne.f32.partialorder %v771, %v771
          %v788 = vsel %vm787, 0.0, %v771
          %789 = vst.msk [vmem:[%s154] ss:$2 sm:$0x7f] %vm552, %v788
          %vm790 = vcmp.ne.f32.partialorder %v786, %v786
          %v791 = vsel %vm790, 0.0, %v786
          %s792 = scalar_lea.vmem %s154, 1 [#allocation9]
          %793 = vst.msk [vmem:[%s792] ss:$2 sm:$0x7f] %vm552, %v791
        $region36: #{tpu_custom_call.1} parent=23 // pred_fallthru
          _
        %s794 = sand.u32 %s66, 1
        %s795 = scalar_lea.sflag [#allocation8], %s794
        %s796 = sand.u32 %s66, 1
        %s797 = smul.addr %s796, 14
        %s798 = scalar_lea.vmem [#allocation9], %s797
        // Predicated region
        $region37: #{tpu_custom_call.1} parent=23 // pred_check
          %p799 = pneg %p76
        $region38: #{tpu_custom_call.1} parent=23 // pred_check_branch
          %801 = sbr.rel (%p799) target = $region40
        $region39: #{tpu_custom_call.1} parent=23 // pred_region
          %s802 = smul.u32 7, %s22
          %s804 = ssub.s32 224, 224
          %805 = vsyncadd %s795, %s804
          %s806 = smul.addr %s802, 32
          %s807 = scalar_lea.hbm %s1, %s806
          %s809 = sshll.u32 %s798, 4
          %s810 = int_to_ptr.vmem [resolvable:$true] %s809
          %812 = dma.vmem_to_hbm [thread:$0]  %s810, 224, %s807, %s795
        $region40: #{tpu_custom_call.1} parent=23 // pred_fallthru
          _
      $region24: #{tpu_custom_call.1} parent=5 // pred_fallthru
        _
      %p813 = scmp.le.s32.totalorder 2, %s13
      // Predicated region
      $region41: #{tpu_custom_call.1} parent=5 // pred_check
        %p814 = pneg %p813
      $region42: #{tpu_custom_call.1} parent=5 // pred_check_branch
        %816 = sbr.rel (%p814) target = $region44
      $region43: #{tpu_custom_call.1} parent=5 // pred_region
        %s817 = ssub.s32 %s13, 2
        // Predicated region
        $region45: #{tpu_custom_call.1} parent=43 // pred_check
          %p818 = pneg %p82
        $region46: #{tpu_custom_call.1} parent=43 // pred_check_branch
          %820 = sbr.rel (%p818) target = $region48
        $region47: #{tpu_custom_call.1} parent=43 // pred_region
          %s821 = sand.u32 %s67, 1
          %s822 = scalar_lea.sflag [#allocation8], %s821
          %s823 = sand.u32 %s67, 1
          %s824 = smul.addr %s823, 14
          %s825 = scalar_lea.vmem [#allocation9], %s824
          %826 = dma.done %s822, 224
        $region48: #{tpu_custom_call.1} parent=43 // pred_fallthru
          _
      $region44: #{tpu_custom_call.1} parent=5 // pred_fallthru
        _
    $region6: #{tpu_custom_call.1} parent=1 // loop_footer
      %s17 = sadd.s32 1, %s13
    $region7: #{tpu_custom_call.1} parent=1 // loop_footer_branch
      %12 = sbr.rel target = $region3
    $region8: #{tpu_custom_call.1} parent=1 // loop_exit
      _
    %827 = vsyncpa [#allocation7], 1
    %s828 = scalar_lea.sflag [#allocation7], 1
    %829 = vsyncpa %s828, 1
    %830 = vsyncpa [#allocation8], 1
    %s831 = scalar_lea.sflag [#allocation8], 1
    %832 = vsyncpa %s831, 1

</llo_original>
